<compile_context>
chip_gen: v6e
topology: v6e:2x2x1
jax: 0.10.0
libtpu: 0.0.40
codegen_flags: <defaults>
</compile_context>

<pallas_src>
import functools

import jax
import jax.numpy as jnp
from jax import lax
from jax.experimental import pallas as pl
from jax.experimental.pallas import tpu as pltpu

HIDDEN = 50


def _round_up(x, m):
    return ((x + m - 1) // m) * m


def _activation_dtype():
    """bf16 bias/tanh chain on v6e/v7x (bf16 VPU/EUP); f32 on v5e and older."""
    try:
        kind = jax.devices()[0].device_kind.lower()
    except Exception:
        kind = ""
    for old_gen in ("v2", "v3", "v4", "v5"):
        if old_gen in kind:
            return jnp.float32
    return jnp.bfloat16


def _choose_batch_tile(B):
    """Large tiles (this kernel is per-grid-step-overhead bound), always a
    multiple of 128 for lane-dense output stores, and >= 2 tiles whenever the
    batch is big enough so v7x megacore can split the 'parallel' batch axis."""
    b128 = _round_up(B, 128)
    if b128 <= 256:
        return b128                                  # single tile; too small to split
    if b128 <= 4096:
        return _round_up(pl.cdiv(b128, 2), 256)      # exactly 2 tiles
    return 2048                                      # many 2048-row tiles


def _value_net_kernel(x_ref, w1_ref, w23_ref, w4_ref, b_ref, o_ref, *, act_dtype):
    # x_ref:   (batch_tile, s_dim) f32 or bf16
    # w1_ref:  (HIDDEN, s_dim)     bf16   (torch layout: (out, in))
    # w23_ref: (2, HIDDEN, HIDDEN) bf16   (w2 stacked with w3)
    # w4_ref:  (1, HIDDEN)         bf16
    # b_ref:   (HIDDEN, 4)         f32    (cols: b1, b2, b3, [b4; 0...])
    # o_ref:   (1, batch_tile)     f32
    x = x_ref[...].astype(jnp.bfloat16)              # (bt, s_dim)

    b1 = b_ref[:, 0:1].astype(act_dtype)             # (HIDDEN, 1)
    b2 = b_ref[:, 1:2].astype(act_dtype)
    b3 = b_ref[:, 2:3].astype(act_dtype)
    b4 = b_ref[0:1, 3:4]                             # (1, 1) f32

    # Layer 1: contract w1's input dim against x's feature dim -> (HIDDEN, bt);
    # batch stays on the 128-lane axis for the rest of the kernel.  Mosaic may
    # emit an XLU vxpose of the bf16 x tile here; the XLU is otherwise idle in
    # this kernel so it stays off the MXU/VPU critical path.
    h = lax.dot_general(
        w1_ref[...], x,
        dimension_numbers=(((1,), (1,)), ((), ())),
        preferred_element_type=jnp.float32,
    ).astype(act_dtype)
    h = jnp.tanh(h + b1)

    # Layer 2: Linear(50, 50) + Tanh   (f32 MXU accumulation, act_dtype epilogue)
    h = jnp.tanh(
        jnp.dot(w23_ref[0], h.astype(jnp.bfloat16),
                preferred_element_type=jnp.float32).astype(act_dtype) + b2)
    # Layer 3: Linear(50, 50) + Tanh
    h = jnp.tanh(
        jnp.dot(w23_ref[1], h.astype(jnp.bfloat16),
                preferred_element_type=jnp.float32).astype(act_dtype) + b3)

    # Layer 4: Linear(50, 1), no activation -> lane-dense (1, bt) f32 store.
    o_ref[...] = (
        jnp.dot(w4_ref[...], h.astype(jnp.bfloat16),
                preferred_element_type=jnp.float32) + b4)


def value_net_forward(state, params, *, batch_tile=None):
    """state: (B, s_dim) float32 or bfloat16.

    params: torch-layout weights w_i: (out, in), biases b_i: (out, 1).
    Returns (B, 1) float32.
    """
    if state.dtype != jnp.bfloat16:        # accept bf16 states as-is; no extra cast pass
        state = state.astype(jnp.float32)
    B, s_dim = state.shape

    # --- choose batch tile ---------------------------------------------------
    if batch_tile is None:
        batch_tile = _choose_batch_tile(B)
    else:
        batch_tile = _round_up(int(batch_tile), 128)

    B_pad = _round_up(B, batch_tile)
    if B_pad != B:
        state = jnp.pad(state, ((0, B_pad - B), (0, 0)))
    num_tiles = B_pad // batch_tile

    act_dtype = _activation_dtype()

    # --- pack / cast parameters ---------------------------------------------
    w1 = params["w1"].astype(jnp.bfloat16)                              # (50, s_dim)
    w23 = jnp.stack([params["w2"], params["w3"]]).astype(jnp.bfloat16)  # (2, 50, 50)
    w4 = params["w4"].astype(jnp.bfloat16)                              # (1, 50)
    b_packed = jnp.concatenate(
        [params["b1"].astype(jnp.float32),
         params["b2"].astype(jnp.float32),
         params["b3"].astype(jnp.float32),
         jnp.pad(params["b4"].astype(jnp.float32), ((0, HIDDEN - 1), (0, 0)))],
        axis=1)                                                         # (50, 4)

    # --- cost hint for the XLA scheduler --------------------------------------
    flops = 2 * B_pad * (s_dim * HIDDEN + 2 * HIDDEN * HIDDEN + HIDDEN)
    transcendentals = 3 * HIDDEN * B_pad
    bytes_accessed = (
        B_pad * s_dim * state.dtype.itemsize + B_pad * 4                # x in, out
        + 2 * (HIDDEN * s_dim + 2 * HIDDEN * HIDDEN + HIDDEN)           # bf16 weights
        + HIDDEN * 4 * 4)                                               # f32 biases
    cost = pl.CostEstimate(flops=flops, transcendentals=transcendentals,
                           bytes_accessed=bytes_accessed)

    const2 = lambda i: (0, 0)
    kernel = functools.partial(_value_net_kernel, act_dtype=act_dtype)

    out2d = pl.pallas_call(
        kernel,
        out_shape=jax.ShapeDtypeStruct((1, B_pad), jnp.float32),
        grid_spec=pltpu.PrefetchScalarGridSpec(
            num_scalar_prefetch=0,
            grid=(num_tiles,),
            in_specs=[
                pl.BlockSpec((batch_tile, s_dim), lambda i: (i, 0)),   # x tile
                pl.BlockSpec(w1.shape, const2),
                pl.BlockSpec(w23.shape, lambda i: (0, 0, 0)),
                pl.BlockSpec(w4.shape, const2),
                pl.BlockSpec(b_packed.shape, const2),
            ],
            out_specs=pl.BlockSpec((1, batch_tile), lambda i: (0, i)),
        ),
        compiler_params=pltpu.CompilerParams(
            dimension_semantics=("parallel",),
        ),
        cost_estimate=cost,
    )(state, w1, w23, w4, b_packed)

    # Lane-dense (1, B_pad) slab -> (B, 1) column (pure layout plumbing).
    return out2d.reshape(B_pad, 1)[:B]


def init_value_net_params(key, s_dim):
    """Mirror torch.nn.Linear default init: U(-1/sqrt(fan_in), +1/sqrt(fan_in)).

    Weights are stored torch-style (out_features, in_features); biases as
    (out_features, 1) columns (matches the kernel's batch-on-lanes layout).
    """
    def linear(key, fan_in, fan_out):
        kw, kb = jax.random.split(key)
        bound = 1.0 / jnp.sqrt(jnp.float32(fan_in))
        w = jax.random.uniform(kw, (fan_out, fan_in), jnp.float32, -bound, bound)
        b = jax.random.uniform(kb, (fan_out, 1), jnp.float32, -bound, bound)
        return w, b

    k1, k2, k3, k4 = jax.random.split(key, 4)
    w1, b1 = linear(k1, s_dim, HIDDEN)
    w2, b2 = linear(k2, HIDDEN, HIDDEN)
    w3, b3 = linear(k3, HIDDEN, HIDDEN)
    w4, b4 = linear(k4, HIDDEN, 1)
    return {"w1": w1, "b1": b1, "w2": w2, "b2": b2,
            "w3": w3, "b3": b3, "w4": w4, "b4": b4}


def value_net_reference(state, params, *, mirror_kernel_precision=True):
    """Pure-JAX reference. With mirror_kernel_precision it uses the same
    bf16-operand / f32-accumulation / act_dtype-epilogue recipe as the kernel."""
    if mirror_kernel_precision:
        op_cast = lambda a: a.astype(jnp.bfloat16)
        act_dtype = _activation_dtype()
    else:
        op_cast = lambda a: a
        act_dtype = jnp.float32
    h = state.astype(jnp.float32)
    for idx, act in ((1, True), (2, True), (3, True), (4, False)):
        w, b = params[f"w{idx}"], params[f"b{idx}"]
        y = jnp.dot(op_cast(h), op_cast(w).T, preferred_element_type=jnp.float32)
        if act:
            h = jnp.tanh(y.astype(act_dtype) + b.T.astype(act_dtype))
        else:
            h = y + b.T
    return h.astype(jnp.float32)  # (B, 1)


if __name__ == "__main__":
    key = jax.random.PRNGKey(0)
    k_params, k_state = jax.random.split(key)

    s_dim = 16
    params = init_value_net_params(k_params, s_dim)

    # Case 1: tiny batch -> single 128-row tile (padded rows sliced off).
    batch_small = 4
    state_small = jax.random.normal(k_state, (batch_small, s_dim), jnp.float32)
    out_small = jax.block_until_ready(value_net_forward(state_small, params))
    ref_small = value_net_reference(state_small, params)
    assert out_small.shape == (batch_small, 1)
    assert jnp.max(jnp.abs(out_small - ref_small)) < 5e-3, \
        "mismatch vs reference (small batch)"

    # Case 2: ragged batch -> 2 tiles of 256 rows: exercises padding, the
    # multi-step pipeline, lane-dense (1, 256) output blocks and (on v7x)
    # megacore sharding of the parallel batch axis.
    batch = 300
    state = jax.random.normal(jax.random.PRNGKey(1), (batch, s_dim), jnp.float32)
    out = jax.block_until_ready(value_net_forward(state, params))
    ref = value_net_reference(state, params)
    assert out.shape == (batch, 1)
    assert jnp.max(jnp.abs(out - ref)) < 5e-3, "mismatch vs reference (tiled)"

    print("KERNEL_OK")
</pallas_src>

<mosaic_0001>
module attributes {stable_mosaic.version = 11 : i64} {
  func.func @_value_net_kernel(%arg0: i32, %arg1: memref<128x16xf32, #tpu.memory_space<vmem>>, %arg2: memref<50x16xbf16, #tpu.memory_space<vmem>>, %arg3: memref<2x50x50xbf16, #tpu.memory_space<vmem>>, %arg4: memref<1x50xbf16, #tpu.memory_space<vmem>>, %arg5: memref<50x4xf32, #tpu.memory_space<vmem>>, %arg6: memref<1x128xf32, #tpu.memory_space<vmem>>) attributes {dimension_semantics = [#tpu.dimension_semantics<parallel>], iteration_bounds = array<i64: 1>, scalar_prefetch = 0 : i64, scratch_operands = 0 : i64, tpu.core_type = #tpu.core_type<tc>, window_params = [{transform_indices = @transform_0, window_bounds = array<i64: 128, 16>}, {pipeline_mode = #tpu.pipeline_mode<synchronous>, transform_indices = @transform_1, window_bounds = array<i64: 50, 16>}, {pipeline_mode = #tpu.pipeline_mode<synchronous>, transform_indices = @transform_2, window_bounds = array<i64: 2, 50, 50>}, {pipeline_mode = #tpu.pipeline_mode<synchronous>, transform_indices = @transform_3, window_bounds = array<i64: 1, 50>}, {pipeline_mode = #tpu.pipeline_mode<synchronous>, transform_indices = @transform_4, window_bounds = array<i64: 50, 4>}, {transform_indices = @transform_5, window_bounds = array<i64: 1, 128>}]} {
    %c0 = arith.constant 0 : index
    %c0_0 = arith.constant 0 : index
    %0 = vector.load %arg1[%c0, %c0_0] : memref<128x16xf32, #tpu.memory_space<vmem>>, vector<128x16xf32>
    %1 = arith.truncf %0 : vector<128x16xf32> to vector<128x16xbf16>
    %c0_1 = arith.constant 0 : index
    %c0_2 = arith.constant 0 : index
    %2 = vector.load %arg5[%c0_1, %c0_2] : memref<50x4xf32, #tpu.memory_space<vmem>>, vector<50x1xf32>
    %3 = arith.truncf %2 : vector<50x1xf32> to vector<50x1xbf16>
    %c0_3 = arith.constant 0 : index
    %c1 = arith.constant 1 : index
    %4 = vector.load %arg5[%c0_3, %c1] : memref<50x4xf32, #tpu.memory_space<vmem>>, vector<50x1xf32>
    %5 = arith.truncf %4 : vector<50x1xf32> to vector<50x1xbf16>
    %c0_4 = arith.constant 0 : index
    %c2 = arith.constant 2 : index
    %6 = vector.load %arg5[%c0_4, %c2] : memref<50x4xf32, #tpu.memory_space<vmem>>, vector<50x1xf32>
    %7 = arith.truncf %6 : vector<50x1xf32> to vector<50x1xbf16>
    %c0_5 = arith.constant 0 : index
    %c3 = arith.constant 3 : index
    %8 = vector.load %arg5[%c0_5, %c3] : memref<50x4xf32, #tpu.memory_space<vmem>>, vector<1x1xf32>
    %c0_6 = arith.constant 0 : index
    %c0_7 = arith.constant 0 : index
    %9 = vector.load %arg2[%c0_6, %c0_7] : memref<50x16xbf16, #tpu.memory_space<vmem>>, vector<50x16xbf16>
    %cst = arith.constant dense<0.000000e+00> : vector<50x128xf32>
    %10 = tpu.matmul %9, %1, %cst {dimension_numbers = #tpu.dot_dimension_numbers<[1], [1], [0], [0], [0, 0, 1, 0], [], []>} : vector<50x16xbf16>, vector<128x16xbf16>, vector<50x128xf32> -> vector<50x128xf32>
    %11 = arith.truncf %10 : vector<50x128xf32> to vector<50x128xbf16>
    %12 = vector.broadcast %3 : vector<50x1xbf16> to vector<50x128xbf16>
    %13 = arith.addf %11, %12 : vector<50x128xbf16>
    %14 = math.tanh %13 : vector<50x128xbf16>
    %c0_8 = arith.constant 0 : index
    %c0_9 = arith.constant 0 : index
    %c0_10 = arith.constant 0 : index
    %15 = vector.load %arg3[%c0_8, %c0_9, %c0_10] : memref<2x50x50xbf16, #tpu.memory_space<vmem>>, vector<1x50x50xbf16>
    %16 = vector.shape_cast %15 : vector<1x50x50xbf16> to vector<50x50xbf16>
    %cst_11 = arith.constant dense<0.000000e+00> : vector<50x128xf32>
    %17 = tpu.matmul %16, %14, %cst_11 {dimension_numbers = #tpu.dot_dimension_numbers<[1], [0], [0], [1], [0, 0, 1, 1], [], []>} : vector<50x50xbf16>, vector<50x128xbf16>, vector<50x128xf32> -> vector<50x128xf32>
    %18 = arith.truncf %17 : vector<50x128xf32> to vector<50x128xbf16>
    %19 = vector.broadcast %5 : vector<50x1xbf16> to vector<50x128xbf16>
    %20 = arith.addf %18, %19 : vector<50x128xbf16>
    %21 = math.tanh %20 : vector<50x128xbf16>
    %c1_12 = arith.constant 1 : index
    %c0_13 = arith.constant 0 : index
    %c0_14 = arith.constant 0 : index
    %22 = vector.load %arg3[%c1_12, %c0_13, %c0_14] : memref<2x50x50xbf16, #tpu.memory_space<vmem>>, vector<1x50x50xbf16>
    %23 = vector.shape_cast %22 : vector<1x50x50xbf16> to vector<50x50xbf16>
    %cst_15 = arith.constant dense<0.000000e+00> : vector<50x128xf32>
    %24 = tpu.matmul %23, %21, %cst_15 {dimension_numbers = #tpu.dot_dimension_numbers<[1], [0], [0], [1], [0, 0, 1, 1], [], []>} : vector<50x50xbf16>, vector<50x128xbf16>, vector<50x128xf32> -> vector<50x128xf32>
    %25 = arith.truncf %24 : vector<50x128xf32> to vector<50x128xbf16>
    %26 = vector.broadcast %7 : vector<50x1xbf16> to vector<50x128xbf16>
    %27 = arith.addf %25, %26 : vector<50x128xbf16>
    %28 = math.tanh %27 : vector<50x128xbf16>
    %c0_16 = arith.constant 0 : index
    %c0_17 = arith.constant 0 : index
    %29 = vector.load %arg4[%c0_16, %c0_17] : memref<1x50xbf16, #tpu.memory_space<vmem>>, vector<1x50xbf16>
    %cst_18 = arith.constant dense<0.000000e+00> : vector<1x128xf32>
    %30 = tpu.matmul %29, %28, %cst_18 {dimension_numbers = #tpu.dot_dimension_numbers<[1], [0], [0], [1], [0, 0, 1, 1], [], []>} : vector<1x50xbf16>, vector<50x128xbf16>, vector<1x128xf32> -> vector<1x128xf32>
    %31 = vector.broadcast %8 : vector<1x1xf32> to vector<1x128xf32>
    %32 = arith.addf %30, %31 : vector<1x128xf32>
    %c0_19 = arith.constant 0 : index
    %c0_20 = arith.constant 0 : index
    %33 = vector.load %arg6[%c0_19, %c0_20] : memref<1x128xf32, #tpu.memory_space<vmem>>, vector<1x128xf32>
    tpu.vector_store %arg6[%c0_19, %c0_20], %32 {strides = array<i32>} : memref<1x128xf32, #tpu.memory_space<vmem>>, vector<1x128xf32>,
    return
  }
  func.func @transform_0(%arg0: i32) -> (i32, i32) {
    %c0_i32 = arith.constant 0 : i32
    %c0_i32_0 = arith.constant 0 : i32
    return %arg0, %c0_i32 : i32, i32
  }
  func.func @transform_1(%arg0: i32) -> (i32, i32) {
    %c0_i32 = arith.constant 0 : i32
    %c0_i32_0 = arith.constant 0 : i32
    %c0_i32_1 = arith.constant 0 : i32
    return %c0_i32, %c0_i32_0 : i32, i32
  }
  func.func @transform_2(%arg0: i32) -> (i32, i32, i32) {
    %c0_i32 = arith.constant 0 : i32
    %c0_i32_0 = arith.constant 0 : i32
    %c0_i32_1 = arith.constant 0 : i32
    %c0_i32_2 = arith.constant 0 : i32
    return %c0_i32, %c0_i32_0, %c0_i32_1 : i32, i32, i32
  }
  func.func @transform_3(%arg0: i32) -> (i32, i32) {
    %c0_i32 = arith.constant 0 : i32
    %c0_i32_0 = arith.constant 0 : i32
    %c0_i32_1 = arith.constant 0 : i32
    return %c0_i32, %c0_i32_0 : i32, i32
  }
  func.func @transform_4(%arg0: i32) -> (i32, i32) {
    %c0_i32 = arith.constant 0 : i32
    %c0_i32_0 = arith.constant 0 : i32
    %c0_i32_1 = arith.constant 0 : i32
    return %c0_i32, %c0_i32_0 : i32, i32
  }
  func.func @transform_5(%arg0: i32) -> (i32, i32) {
    %c0_i32 = arith.constant 0 : i32
    %c0_i32_0 = arith.constant 0 : i32
    return %c0_i32, %arg0 : i32, i32
  }
}

</mosaic_0001>

<llo_original>
// kernel: tpu_custom_call.1
$region0: #{tpu_custom_call.1}
  #allocation0 [shape = 'u32[]', space=smem, size = 0x4, offset = 0x4, fixed_abs, tag = 'smem constant byte address 0x4 - core index']
  #allocation1 [shape = 'u32[144,128]{1,0:T(1,128)}', space=vmem, size = 0x12000, scoped, tag = 'internal scratch']
  %s0 = inlined_call_operand.vmem [shape: f32[128,16], index: 0, kind: input, shape index: {}]
  %s1 = inlined_call_operand.vmem [shape: bf16[50,16], index: 1, kind: input, shape index: {}]
  %s2 = inlined_call_operand.vmem [shape: bf16[2,50,50], index: 2, kind: input, shape index: {}]
  %s3 = inlined_call_operand.vmem [shape: bf16[1,50], index: 3, kind: input, shape index: {}]
  %s4 = inlined_call_operand.vmem [shape: f32[50,4], index: 4, kind: input, shape index: {}]
  %s5 = inlined_call_operand.hbm [shape: f32[1,128], index: 5, kind: output, shape index: {}]
  %s6 = sld [smem:[#allocation0]]
  $region30: #{tpu_custom_call.1} parent=0
    _
  %s8 = ssub.s32 1, %s6
  %s9 = scalar_select 0, %s8, %s6
  $region1: #{tpu_custom_call.1} parent=0
    #allocation2 [shape = 'u8[512]{0}', space=vmem, size = 0x400, scoped, tag = 'output window, operand 0, single buffered']
    #allocation3 [shape = 's32[1]{0}', space=sflag, size = 0x4, scoped, tag = 'scoped memory for tpu_custom_call.1']
    %10 = vsyncpa [#allocation3], 0
    // Predicated region
    $region2: #{tpu_custom_call.1} parent=1 // pred_check
      _
    $region3: #{tpu_custom_call.1} parent=1 // pred_check_branch
      %12 = sbr.rel (0) target = $region5
    $region4: #{tpu_custom_call.1} parent=1 // pred_region
      _
    $region5: #{tpu_custom_call.1} parent=1 // pred_fallthru
      _
    // Predicated region
    $region6: #{tpu_custom_call.1} parent=1 // pred_check
      _
    $region7: #{tpu_custom_call.1} parent=1 // pred_check_branch
      %14 = sbr.rel (0) target = $region9
    $region8: #{tpu_custom_call.1} parent=1 // pred_region
      _
    $region9: #{tpu_custom_call.1} parent=1 // pred_fallthru
      _
    // Predicated region
    $region10: #{tpu_custom_call.1} parent=1 // pred_check
      _
    $region11: #{tpu_custom_call.1} parent=1 // pred_check_branch
      %16 = sbr.rel (0) target = $region13
    $region12: #{tpu_custom_call.1} parent=1 // pred_region
      _
    $region13: #{tpu_custom_call.1} parent=1 // pred_fallthru
      _
    // Predicated region
    $region14: #{tpu_custom_call.1} parent=1 // pred_check
      _
    $region15: #{tpu_custom_call.1} parent=1 // pred_check_branch
      %18 = sbr.rel (0) target = $region17
    $region16: #{tpu_custom_call.1} parent=1 // pred_region
      _
    $region17: #{tpu_custom_call.1} parent=1 // pred_fallthru
      _
    // Predicated region
    $region18: #{tpu_custom_call.1} parent=1 // pred_check
      _
    $region19: #{tpu_custom_call.1} parent=1 // pred_check_branch
      %20 = sbr.rel (0) target = $region21
    $region20: #{tpu_custom_call.1} parent=1 // pred_region
      _
    $region21: #{tpu_custom_call.1} parent=1 // pred_fallthru
      _
    %v22 = vld [vmem:[%s0] sm:$0xff]
    %v23 = vld [vmem:[%s0 + $0x8] sm:$0xff]
    %v24 = vld [vmem:[%s0 + $0x10] sm:$0xff]
    %v25 = vld [vmem:[%s0 + $0x18] sm:$0xff]
    %v26 = vld [vmem:[%s0 + $0x20] sm:$0xff]
    %v27 = vld [vmem:[%s0 + $0x28] sm:$0xff]
    %v28 = vld [vmem:[%s0 + $0x30] sm:$0xff]
    %v29 = vld [vmem:[%s0 + $0x38] sm:$0xff]
    %v30 = vld [vmem:[%s0 + $0x40] sm:$0xff]
    %v31 = vld [vmem:[%s0 + $0x48] sm:$0xff]
    %v32 = vld [vmem:[%s0 + $0x50] sm:$0xff]
    %v33 = vld [vmem:[%s0 + $0x58] sm:$0xff]
    %v34 = vld [vmem:[%s0 + $0x60] sm:$0xff]
    %v35 = vld [vmem:[%s0 + $0x68] sm:$0xff]
    %v36 = vld [vmem:[%s0 + $0x70] sm:$0xff]
    %v37 = vld [vmem:[%s0 + $0x78] sm:$0xff]
    %v38 = vpack.c.bf16 %v23, %v22
    %v39 = vpack.c.bf16 %v25, %v24
    %v40 = vpack.c.bf16 %v27, %v26
    %v41 = vpack.c.bf16 %v29, %v28
    %v42 = vpack.c.bf16 %v31, %v30
    %v43 = vpack.c.bf16 %v33, %v32
    %v44 = vpack.c.bf16 %v35, %v34
    %v45 = vpack.c.bf16 %v37, %v36
    %v46 = vld [vmem:[%s4] sm:$0xff]
    %v47 = vld [vmem:[%s4 + $0x8] sm:$0xff]
    %v48 = vld [vmem:[%s4 + $0x10] sm:$0xff]
    %v49 = vld [vmem:[%s4 + $0x18] sm:$0xff]
    %v50 = vld [vmem:[%s4 + $0x20] sm:$0xff]
    %v51 = vld [vmem:[%s4 + $0x28] sm:$0xff]
    %v52 = vld [vmem:[%s4 + $0x30] sm:$0x3]
    %v53 = vpack.c.bf16 %v47, %v46
    %v54 = vpack.c.bf16 %v49, %v48
    %v55 = vpack.c.bf16 %v51, %v50
    %v56 = vpack.c.bf16 %v52, %v52
    %v57 = vld [vmem:[%s4] sm:$0x1]
    %v58 = vld [vmem:[%s1] sm:$0xf]
    %v59 = vld [vmem:[%s1 + $0x4] sm:$0xf]
    %v60 = vld [vmem:[%s1 + $0x8] sm:$0xf]
    %v61 = vld [vmem:[%s1 + $0xc] sm:$0xf]
    %v62 = vld [vmem:[%s1 + $0x10] sm:$0xf]
    %v63 = vld [vmem:[%s1 + $0x14] sm:$0xf]
    %v64 = vld [vmem:[%s1 + $0x18] sm:$0x1]
    %v72 = vunpack.c.l.b16 %v58
    %v73 = vunpack.c.l.b16 %v59
    %v74 = vunpack.c.l.b16 %v60
    %v75 = vunpack.c.l.b16 %v61
    %v76 = vunpack.c.l.b16 %v62
    %v77 = vunpack.c.l.b16 %v63
    %v78 = vunpack.c.l.b16 %v64
    %v79 = vpack.c.b16 %v73, %v72
    %v80 = vpack.c.b16 %v75, %v74
    %v81 = vpack.c.b16 %v77, %v76
    %v82 = vpack.c.b16 %v78, %v78
    %vm83 = vcmask 130048
    %v85 = vsel %vm83, %v79, 0
    %v88 = vsel %vm83, %v80, 0
    %v91 = vsel %vm83, %v81, 0
    %v94 = vsel %vm83, %v82, 0
    %v97 = vsel %vm83, %v38, 0
    %v100 = vsel %vm83, %v39, 0
    %v103 = vsel %vm83, %v40, 0
    %v106 = vsel %vm83, %v41, 0
    %v109 = vsel %vm83, %v42, 0
    %v112 = vsel %vm83, %v43, 0
    %v115 = vsel %vm83, %v44, 0
    %v118 = vsel %vm83, %v45, 0
    %120 = vmatprep.subr.bf16.mxu0 0
    %121 = vmatpush1.bf16.xpose.msra.mxu0 %v118
    %122 = vmatprep.subr.bf16.mxu0 0
    %123 = vmatpush1.bf16.xpose.msra.mxu0 %v115
    %124 = vmatprep.subr.bf16.mxu0 0
    %125 = vmatpush1.bf16.xpose.msra.mxu0 %v112
    %126 = vmatprep.subr.bf16.mxu0 0
    %127 = vmatpush1.bf16.xpose.msra.mxu0 %v109
    %128 = vmatprep.subr.bf16.mxu0 0
    %129 = vmatpush1.bf16.xpose.msra.mxu0 %v106
    %130 = vmatprep.subr.bf16.mxu0 0
    %131 = vmatpush1.bf16.xpose.msra.mxu0 %v103
    %132 = vmatprep.subr.bf16.mxu0 0
    %133 = vmatpush1.bf16.xpose.msra.mxu0 %v100
    %134 = vmatprep.subr.bf16.mxu0 0
    %135 = vmatpush1.bf16.xpose.msra.mxu0 %v97
    %136 = vmatprep.subr.bf16.mxu0 0
    %137 = vmatpush2.bf16.xpose.msra.mxu0 0
    %138 = vmatprep.subr.bf16.mxu0 0
    %139 = vmatpush2.bf16.xpose.msra.mxu0 0
    %140 = vmatprep.subr.bf16.mxu0 0
    %141 = vmatpush2.bf16.xpose.msra.mxu0 0
    %142 = vmatprep.subr.bf16.mxu0 0
    %143 = vmatpush2.bf16.xpose.msra.mxu0 0
    %144 = vmatprep.subr.bf16.mxu0 0
    %145 = vmatpush2.bf16.xpose.msra.mxu0 0
    %146 = vmatprep.subr.bf16.mxu0 0
    %147 = vmatpush2.bf16.xpose.msra.mxu0 0
    %148 = vmatprep.subr.bf16.mxu0 0
    %149 = vmatpush2.bf16.xpose.msra.mxu0 0
    %150 = vmatprep.subr.bf16.mxu0 0
    %151 = vmatpush2.bf16.xpose.msra.mxu0 0
    %152 = vmatprep.mubr.bf16.mxu0 0
    %153 = vmatmul.mubr.bf16.gmra.mxu0 %v85
    %v154 = vpop.f32.mrf.mxu0
    %v155 = vadd.f32 0.0, %v154
    %v156 = vpop.f32.mrf.mxu0
    %v157 = vpop.f32.mrf.mxu0
    %v158 = vadd.f32 0.0, %v157
    %v159 = vpop.f32.mrf.mxu0
    %160 = vmatprep.mubr.bf16.mxu0 0
    %161 = vmatmul.mubr.bf16.gmra.mxu0 %v88
    %v162 = vpop.f32.mrf.mxu0
    %v163 = vadd.f32 0.0, %v162
    %v164 = vpop.f32.mrf.mxu0
    %v165 = vpop.f32.mrf.mxu0
    %v166 = vadd.f32 0.0, %v165
    %v167 = vpop.f32.mrf.mxu0
    %168 = vmatprep.mubr.bf16.mxu0 0
    %169 = vmatmul.mubr.bf16.gmra.mxu0 %v91
    %v170 = vpop.f32.mrf.mxu0
    %v171 = vadd.f32 0.0, %v170
    %v172 = vpop.f32.mrf.mxu0
    %v173 = vpop.f32.mrf.mxu0
    %v174 = vadd.f32 0.0, %v173
    %v175 = vpop.f32.mrf.mxu0
    %176 = vmatprep.mubr.bf16.mxu0 0
    %177 = vmatmul.mubr.bf16.gmra.mxu0 %v94
    %v178 = vpop.f32.mrf.mxu0
    %v179 = vadd.f32 0.0, %v178
    %v180 = vpop.f32.mrf.mxu0
    %v181 = vpop.f32.mrf.mxu0
    %v182 = vpop.f32.mrf.mxu0
    %183 = vdwg.mxu0
    %v184 = vpack.c.bf16 %v158, %v155
    %v185 = vpack.c.bf16 %v166, %v163
    %v186 = vpack.c.bf16 %v174, %v171
    %v187 = vpack.c.bf16 %v179, %v179
    %189 = vset.pattern.permute.xlu0 0
    %190 = vperm.xlu0 %189, %v53
    %v191 = vpop.permute.xlu0 %190
    %194 = vset.pattern.permute.xlu0 0
    %195 = vperm.xlu0 %194, %v54
    %v196 = vpop.permute.xlu0 %195
    %199 = vset.pattern.permute.xlu0 0
    %200 = vperm.xlu0 %199, %v55
    %v201 = vpop.permute.xlu0 %200
    %204 = vset.pattern.permute.xlu0 0
    %205 = vperm.xlu0 %204, %v56
    %v206 = vpop.permute.xlu0 %205
    %v208 = vadd.bf16 %v184, %v191
    %v209 = vadd.bf16 %v185, %v196
    %v210 = vadd.bf16 %v186, %v201
    %v211 = vadd.bf16 %v187, %v206
    %v212 = vtanh.bf16.pop %v208
    %v213 = vtanh.bf16.pop %v209
    %v214 = vtanh.bf16.pop %v210
    %v215 = vtanh.bf16.pop %v211
    %v216 = vld [vmem:[%s2] sm:$0xf]
    %v217 = vld [vmem:[%s2 + $0x4] sm:$0xf]
    %v218 = vld [vmem:[%s2 + $0x8] sm:$0xf]
    %v219 = vld [vmem:[%s2 + $0xc] sm:$0xf]
    %v220 = vld [vmem:[%s2 + $0x10] sm:$0xf]
    %v221 = vld [vmem:[%s2 + $0x14] sm:$0xf]
    %v222 = vld [vmem:[%s2 + $0x18] sm:$0x1]
    %v230 = vunpack.c.l.b16 %v216
    %v231 = vunpack.c.l.b16 %v217
    %v232 = vunpack.c.l.b16 %v218
    %v233 = vunpack.c.l.b16 %v219
    %v234 = vunpack.c.l.b16 %v220
    %v235 = vunpack.c.l.b16 %v221
    %v236 = vunpack.c.l.b16 %v222
    %v237 = vpack.c.b16 %v231, %v230
    %v238 = vpack.c.b16 %v233, %v232
    %v239 = vpack.c.b16 %v235, %v234
    %v240 = vpack.c.b16 %v236, %v236
    %vm241 = vcmask 408576
    %v243 = vsel %vm241, %v237, 0
    %v246 = vsel %vm241, %v238, 0
    %v249 = vsel %vm241, %v239, 0
    %v252 = vsel %vm241, %v240, 0
    %vm254 = vcmask 1040384
    %v256 = vsel %vm254, %v215, 0
    %258 = vmatprep.subr.bf16.mxu0 0
    %259 = vmatpush1.bf16.msra.mxu0 0
    %260 = vmatprep.subr.bf16.mxu0 0
    %261 = vmatpush1.bf16.msra.mxu0 0
    %262 = vmatprep.subr.bf16.mxu0 0
    %263 = vmatpush1.bf16.msra.mxu0 0
    %264 = vmatprep.subr.bf16.mxu0 0
    %265 = vmatpush1.bf16.msra.mxu0 0
    %266 = vmatprep.subr.bf16.mxu0 0
    %267 = vmatpush1.bf16.msra.mxu0 %v256
    %268 = vmatprep.subr.bf16.mxu0 0
    %269 = vmatpush1.bf16.msra.mxu0 %v214
    %270 = vmatprep.subr.bf16.mxu0 0
    %271 = vmatpush1.bf16.msra.mxu0 %v213
    %272 = vmatprep.subr.bf16.mxu0 0
    %273 = vmatpush1.bf16.msra.mxu0 %v212
    %274 = vmatprep.subr.bf16.mxu0 0
    %275 = vmatpush2.bf16.msra.mxu0 0
    %276 = vmatprep.subr.bf16.mxu0 0
    %277 = vmatpush2.bf16.msra.mxu0 0
    %278 = vmatprep.subr.bf16.mxu0 0
    %279 = vmatpush2.bf16.msra.mxu0 0
    %280 = vmatprep.subr.bf16.mxu0 0
    %281 = vmatpush2.bf16.msra.mxu0 0
    %282 = vmatprep.subr.bf16.mxu0 0
    %283 = vmatpush2.bf16.msra.mxu0 0
    %284 = vmatprep.subr.bf16.mxu0 0
    %285 = vmatpush2.bf16.msra.mxu0 0
    %286 = vmatprep.subr.bf16.mxu0 0
    %287 = vmatpush2.bf16.msra.mxu0 0
    %288 = vmatprep.subr.bf16.mxu0 0
    %289 = vmatpush2.bf16.msra.mxu0 0
    %290 = vmatprep.mubr.bf16.mxu0 0
    %291 = vmatmul.mubr.bf16.gmra.mxu0 %v243
    %v292 = vpop.f32.mrf.mxu0
    %v293 = vadd.f32 0.0, %v292
    %v294 = vpop.f32.mrf.mxu0
    %v295 = vpop.f32.mrf.mxu0
    %v296 = vadd.f32 0.0, %v295
    %v297 = vpop.f32.mrf.mxu0
    %298 = vmatprep.mubr.bf16.mxu0 0
    %299 = vmatmul.mubr.bf16.gmra.mxu0 %v246
    %v300 = vpop.f32.mrf.mxu0
    %v301 = vadd.f32 0.0, %v300
    %v302 = vpop.f32.mrf.mxu0
    %v303 = vpop.f32.mrf.mxu0
    %v304 = vadd.f32 0.0, %v303
    %v305 = vpop.f32.mrf.mxu0
    %306 = vmatprep.mubr.bf16.mxu0 0
    %307 = vmatmul.mubr.bf16.gmra.mxu0 %v249
    %v308 = vpop.f32.mrf.mxu0
    %v309 = vadd.f32 0.0, %v308
    %v310 = vpop.f32.mrf.mxu0
    %v311 = vpop.f32.mrf.mxu0
    %v312 = vadd.f32 0.0, %v311
    %v313 = vpop.f32.mrf.mxu0
    %314 = vmatprep.mubr.bf16.mxu0 0
    %315 = vmatmul.mubr.bf16.gmra.mxu0 %v252
    %v316 = vpop.f32.mrf.mxu0
    %v317 = vadd.f32 0.0, %v316
    %v318 = vpop.f32.mrf.mxu0
    %v319 = vpop.f32.mrf.mxu0
    %v320 = vpop.f32.mrf.mxu0
    %321 = vdwg.mxu0
    %v322 = vpack.c.bf16 %v296, %v293
    %v323 = vpack.c.bf16 %v304, %v301
    %v324 = vpack.c.bf16 %v312, %v309
    %v325 = vpack.c.bf16 %v317, %v317
    %326 = vset.pattern.permute.xlu0 1
    %327 = vperm.xlu0 %326, %v53
    %v328 = vpop.permute.xlu0 %327
    %330 = vset.pattern.permute.xlu0 1
    %331 = vperm.xlu0 %330, %v54
    %v332 = vpop.permute.xlu0 %331
    %334 = vset.pattern.permute.xlu0 1
    %335 = vperm.xlu0 %334, %v55
    %v336 = vpop.permute.xlu0 %335
    %338 = vset.pattern.permute.xlu0 1
    %339 = vperm.xlu0 %338, %v56
    %v340 = vpop.permute.xlu0 %339
    %v342 = vadd.bf16 %v322, %v328
    %v343 = vadd.bf16 %v323, %v332
    %v344 = vadd.bf16 %v324, %v336
    %v345 = vadd.bf16 %v325, %v340
    %v346 = vtanh.bf16.pop %v342
    %v347 = vtanh.bf16.pop %v343
    %v348 = vtanh.bf16.pop %v344
    %v349 = vtanh.bf16.pop %v345
    %s350 = scalar_lea.vmem %s2, 28
    %v351 = vld [vmem:[%s350] sm:$0xf]
    %v352 = vld [vmem:[%s350 + $0x4] sm:$0xf]
    %v353 = vld [vmem:[%s350 + $0x8] sm:$0xf]
    %v354 = vld [vmem:[%s350 + $0xc] sm:$0xf]
    %v355 = vld [vmem:[%s350 + $0x10] sm:$0xf]
    %v356 = vld [vmem:[%s350 + $0x14] sm:$0xf]
    %v357 = vld [vmem:[%s350 + $0x18] sm:$0x1]
    %v365 = vunpack.c.l.b16 %v351
    %v366 = vunpack.c.l.b16 %v352
    %v367 = vunpack.c.l.b16 %v353
    %v368 = vunpack.c.l.b16 %v354
    %v369 = vunpack.c.l.b16 %v355
    %v370 = vunpack.c.l.b16 %v356
    %v371 = vunpack.c.l.b16 %v357
    %v372 = vpack.c.b16 %v366, %v365
    %v373 = vpack.c.b16 %v368, %v367
    %v374 = vpack.c.b16 %v370, %v369
    %v375 = vpack.c.b16 %v371, %v371
    %v377 = vsel %vm241, %v372, 0
    %v380 = vsel %vm241, %v373, 0
    %v383 = vsel %vm241, %v374, 0
    %v386 = vsel %vm241, %v375, 0
    %v389 = vsel %vm254, %v349, 0
    %391 = vmatprep.subr.bf16.mxu0 0
    %392 = vmatpush1.bf16.msra.mxu0 0
    %393 = vmatprep.subr.bf16.mxu0 0
    %394 = vmatpush1.bf16.msra.mxu0 0
    %395 = vmatprep.subr.bf16.mxu0 0
    %396 = vmatpush1.bf16.msra.mxu0 0
    %397 = vmatprep.subr.bf16.mxu0 0
    %398 = vmatpush1.bf16.msra.mxu0 0
    %399 = vmatprep.subr.bf16.mxu0 0
    %400 = vmatpush1.bf16.msra.mxu0 %v389
    %401 = vmatprep.subr.bf16.mxu0 0
    %402 = vmatpush1.bf16.msra.mxu0 %v348
    %403 = vmatprep.subr.bf16.mxu0 0
    %404 = vmatpush1.bf16.msra.mxu0 %v347
    %405 = vmatprep.subr.bf16.mxu0 0
    %406 = vmatpush1.bf16.msra.mxu0 %v346
    %407 = vmatprep.subr.bf16.mxu0 0
    %408 = vmatpush2.bf16.msra.mxu0 0
    %409 = vmatprep.subr.bf16.mxu0 0
    %410 = vmatpush2.bf16.msra.mxu0 0
    %411 = vmatprep.subr.bf16.mxu0 0
    %412 = vmatpush2.bf16.msra.mxu0 0
    %413 = vmatprep.subr.bf16.mxu0 0
    %414 = vmatpush2.bf16.msra.mxu0 0
    %415 = vmatprep.subr.bf16.mxu0 0
    %416 = vmatpush2.bf16.msra.mxu0 0
    %417 = vmatprep.subr.bf16.mxu0 0
    %418 = vmatpush2.bf16.msra.mxu0 0
    %419 = vmatprep.subr.bf16.mxu0 0
    %420 = vmatpush2.bf16.msra.mxu0 0
    %421 = vmatprep.subr.bf16.mxu0 0
    %422 = vmatpush2.bf16.msra.mxu0 0
    %423 = vmatprep.mubr.bf16.mxu0 0
    %424 = vmatmul.mubr.bf16.gmra.mxu0 %v377
    %v425 = vpop.f32.mrf.mxu0
    %v426 = vadd.f32 0.0, %v425
    %v427 = vpop.f32.mrf.mxu0
    %v428 = vpop.f32.mrf.mxu0
    %v429 = vadd.f32 0.0, %v428
    %v430 = vpop.f32.mrf.mxu0
    %431 = vmatprep.mubr.bf16.mxu0 0
    %432 = vmatmul.mubr.bf16.gmra.mxu0 %v380
    %v433 = vpop.f32.mrf.mxu0
    %v434 = vadd.f32 0.0, %v433
    %v435 = vpop.f32.mrf.mxu0
    %v436 = vpop.f32.mrf.mxu0
    %v437 = vadd.f32 0.0, %v436
    %v438 = vpop.f32.mrf.mxu0
    %439 = vmatprep.mubr.bf16.mxu0 0
    %440 = vmatmul.mubr.bf16.gmra.mxu0 %v383
    %v441 = vpop.f32.mrf.mxu0
    %v442 = vadd.f32 0.0, %v441
    %v443 = vpop.f32.mrf.mxu0
    %v444 = vpop.f32.mrf.mxu0
    %v445 = vadd.f32 0.0, %v444
    %v446 = vpop.f32.mrf.mxu0
    %447 = vmatprep.mubr.bf16.mxu0 0
    %448 = vmatmul.mubr.bf16.gmra.mxu0 %v386
    %v449 = vpop.f32.mrf.mxu0
    %v450 = vadd.f32 0.0, %v449
    %v451 = vpop.f32.mrf.mxu0
    %v452 = vpop.f32.mrf.mxu0
    %v453 = vpop.f32.mrf.mxu0
    %454 = vdwg.mxu0
    %v455 = vpack.c.bf16 %v429, %v426
    %v456 = vpack.c.bf16 %v437, %v434
    %v457 = vpack.c.bf16 %v445, %v442
    %v458 = vpack.c.bf16 %v450, %v450
    %459 = vset.pattern.permute.xlu0 2
    %460 = vperm.xlu0 %459, %v53
    %v461 = vpop.permute.xlu0 %460
    %463 = vset.pattern.permute.xlu0 2
    %464 = vperm.xlu0 %463, %v54
    %v465 = vpop.permute.xlu0 %464
    %467 = vset.pattern.permute.xlu0 2
    %468 = vperm.xlu0 %467, %v55
    %v469 = vpop.permute.xlu0 %468
    %471 = vset.pattern.permute.xlu0 2
    %472 = vperm.xlu0 %471, %v56
    %v473 = vpop.permute.xlu0 %472
    %v475 = vadd.bf16 %v455, %v461
    %v476 = vadd.bf16 %v456, %v465
    %v477 = vadd.bf16 %v457, %v469
    %v478 = vadd.bf16 %v458, %v473
    %v479 = vtanh.bf16.pop %v475
    %v480 = vtanh.bf16.pop %v476
    %v481 = vtanh.bf16.pop %v477
    %v482 = vtanh.bf16.pop %v478
    %v483 = vld [vmem:[%s3] sm:$0x1]
    %485 = vset.pattern.permute.xlu0 3
    %486 = vperm.xlu0 %485, %v57
    %v487 = vpop.permute.xlu0 %486
    %v490 = vsel %vm241, %v483, 0
    %v493 = vsel %vm254, %v482, 0
    %495 = vmatprep.subr.bf16.mxu0 0
    %496 = vmatpush1.bf16.msra.mxu0 0
    %497 = vmatprep.subr.bf16.mxu0 0
    %498 = vmatpush1.bf16.msra.mxu0 0
    %499 = vmatprep.subr.bf16.mxu0 0
    %500 = vmatpush1.bf16.msra.mxu0 0
    %501 = vmatprep.subr.bf16.mxu0 0
    %502 = vmatpush1.bf16.msra.mxu0 0
    %503 = vmatprep.subr.bf16.mxu0 0
    %504 = vmatpush1.bf16.msra.mxu0 %v493
    %505 = vmatprep.subr.bf16.mxu0 0
    %506 = vmatpush1.bf16.msra.mxu0 %v481
    %507 = vmatprep.subr.bf16.mxu0 0
    %508 = vmatpush1.bf16.msra.mxu0 %v480
    %509 = vmatprep.subr.bf16.mxu0 0
    %510 = vmatpush1.bf16.msra.mxu0 %v479
    %511 = vmatprep.subr.bf16.mxu0 0
    %512 = vmatpush2.bf16.msra.mxu0 0
    %513 = vmatprep.subr.bf16.mxu0 0
    %514 = vmatpush2.bf16.msra.mxu0 0
    %515 = vmatprep.subr.bf16.mxu0 0
    %516 = vmatpush2.bf16.msra.mxu0 0
    %517 = vmatprep.subr.bf16.mxu0 0
    %518 = vmatpush2.bf16.msra.mxu0 0
    %519 = vmatprep.subr.bf16.mxu0 0
    %520 = vmatpush2.bf16.msra.mxu0 0
    %521 = vmatprep.subr.bf16.mxu0 0
    %522 = vmatpush2.bf16.msra.mxu0 0
    %523 = vmatprep.subr.bf16.mxu0 0
    %524 = vmatpush2.bf16.msra.mxu0 0
    %525 = vmatprep.subr.bf16.mxu0 0
    %526 = vmatpush2.bf16.msra.mxu0 0
    %527 = vmatprep.mubr.bf16.mxu0 0
    %528 = vmatmul.mubr.bf16.gmra.mxu0 %v490
    %v529 = vpop.f32.mrf.mxu0
    %v530 = vadd.f32 %v487, %v529
    %v531 = vpop.f32.mrf.mxu0
    %v532 = vpop.f32.mrf.mxu0
    %v533 = vpop.f32.mrf.mxu0
    %534 = vdwg.mxu0
    %535 = vst [vmem:[#allocation2] sm:$0x1] %v530
    // Predicated region
    $region22: #{tpu_custom_call.1} parent=1 // pred_check
      _
    $region23: #{tpu_custom_call.1} parent=1 // pred_check_branch
      %537 = sbr.rel (0) target = $region25
    $region24: #{tpu_custom_call.1} parent=1 // pred_region
      %s539 = ssub.s32 16, 16
      %540 = vsyncadd [#allocation3], %s539
      %s542 = sshll.u32 [#allocation2], 4
      %s543 = int_to_ptr.vmem [resolvable:$true] %s542
      %545 = dma.vmem_to_hbm [thread:$0]  %s543, 16, %s5, [#allocation3]
    $region25: #{tpu_custom_call.1} parent=1 // pred_fallthru
      _
    // Predicated region
    $region26: #{tpu_custom_call.1} parent=1 // pred_check
      _
    $region27: #{tpu_custom_call.1} parent=1 // pred_check_branch
      %547 = sbr.rel (0) target = $region29
    $region28: #{tpu_custom_call.1} parent=1 // pred_region
      %548 = dma.done [#allocation3], 16
    $region29: #{tpu_custom_call.1} parent=1 // pred_fallthru
      _
    %549 = vsyncpa [#allocation3], 1

</llo_original>
